<compile_context>
chip_gen: v7x
topology: tpu7x:2x2x1
jax: 0.10.0
libtpu: 0.0.40
codegen_flags: <defaults>
</compile_context>

<pallas_src>
import math

import jax
import jax.numpy as jnp
from jax.experimental import pallas as pl
from jax.experimental.pallas import tpu as pltpu


def _round_up(v, m):
    return ((v + m - 1) // m) * m


# ---------------------------------------------------------------------------
# Kernels
# ---------------------------------------------------------------------------
def _linear_kernel_fullk(x_ref, w_ref, b_ref, o_ref):
    # Single-K-block path: no accumulator scratch, no revisited output.
    # x_ref: (tm, K), w_ref: (K, tn)  [weight pre-transposed to (in, out)],
    # b_ref: (1, tn) f32, o_ref: (tm, tn).
    x = x_ref[...].astype(w_ref.dtype)  # no-op if already cast outside
    acc = jnp.dot(x, w_ref[...], preferred_element_type=jnp.float32)
    o_ref[...] = (acc + b_ref[...]).astype(o_ref.dtype)


def _linear_kernel_acc(x_ref, w_ref, b_ref, o_ref, acc_ref):
    # Tiled-K path: f32 VMEM accumulator, zeroed at k==0, bias-add + cast only
    # on the last K step.
    k = pl.program_id(2)

    @pl.when(k == 0)
    def _():
        acc_ref[...] = jnp.zeros_like(acc_ref)

    x = x_ref[...].astype(w_ref.dtype)  # no-op if already cast outside
    acc_ref[...] += jnp.dot(x, w_ref[...], preferred_element_type=jnp.float32)

    @pl.when(k == pl.num_programs(2) - 1)
    def _():
        o_ref[...] = (acc_ref[...] + b_ref[...]).astype(o_ref.dtype)


# ---------------------------------------------------------------------------
# Module wrapper (parameter prep hoisted to __init__)
# ---------------------------------------------------------------------------
class LinearNorm:
    """Pallas TPU forward of torch LinearNorm: y = x @ weight.T + bias.

    weight: (out_channels, in_channels)  -- torch nn.Linear convention
    bias:   (out_channels,) or None
    """

    def __init__(self, weight, bias=None, *, compute_dtype=jnp.bfloat16,
                 tm_max=512, tn_max=512, tk_max=2048):
        assert tm_max % 8 == 0 and tn_max % 128 == 0 and tk_max % 128 == 0
        out_ch, in_ch = weight.shape
        self.out_ch, self.in_ch = int(out_ch), int(in_ch)
        self.tm_max = tm_max
        self.compute_dtype = jnp.dtype(compute_dtype or weight.dtype)

        # --- N / K tile selection -----------------------------------------
        # Full extent when it fits the cap: avoids padding, keeps the weight
        # VMEM-resident, and (for K) drops the reduction grid axis entirely.
        if self.out_ch <= tn_max:
            self.tn, self.np_ = self.out_ch, self.out_ch
        else:
            self.tn, self.np_ = tn_max, _round_up(self.out_ch, tn_max)
        if self.in_ch <= tk_max:
            self.tk, self.kp = self.in_ch, self.in_ch
        else:
            self.tk, self.kp = tk_max, _round_up(self.in_ch, tk_max)
        self.k_tiled = (self.tk != self.kp)

        # --- One-time parameter prep (hoisted out of the call path) --------
        # (out, in) -> (in, out): canonical (tk, tn) MXU block, no per-tile
        # XLU transpose.  Zero-pad to tile multiples; cast to compute dtype.
        w = jnp.asarray(weight).T
        if (self.kp, self.np_) != (self.in_ch, self.out_ch):
            w = jnp.pad(w, ((0, self.kp - self.in_ch),
                            (0, self.np_ - self.out_ch)))
        self.w = w.astype(self.compute_dtype)

        if bias is None:
            b = jnp.zeros((self.out_ch,), jnp.float32)
        else:
            b = jnp.asarray(bias).astype(jnp.float32)
        if self.np_ != self.out_ch:
            b = jnp.pad(b, (0, self.np_ - self.out_ch))
        self.b = b.reshape(1, self.np_)

    def __call__(self, x):
        assert x.shape[-1] == self.in_ch
        lead = x.shape[:-1]
        m = math.prod(lead) if lead else 1
        x2d = x.reshape(m, self.in_ch)
        out_dtype = x.dtype

        # --- M tile: full extent (no pad) when it fits the cap -------------
        if m <= self.tm_max:
            tm, mp = m, m
        else:
            tm, mp = self.tm_max, _round_up(m, self.tm_max)

        n_tiles_m = mp // tm
        n_tiles_n = self.np_ // self.tn

        # Cast x outside the kernel only when it is re-streamed across N tiles
        # (the extra pass then amortizes by halving every re-read); otherwise
        # the kernel casts the tile in-register with zero extra HBM traffic.
        if x2d.dtype != self.compute_dtype and n_tiles_n > 1:
            x2d = x2d.astype(self.compute_dtype)

        pad_m, pad_k = mp - m, self.kp - self.in_ch
        if pad_m or pad_k:
            x2d = jnp.pad(x2d, ((0, pad_m), (0, pad_k)))

        x_isz = jnp.dtype(x2d.dtype).itemsize
        w_isz = jnp.dtype(self.compute_dtype).itemsize
        o_isz = jnp.dtype(out_dtype).itemsize

        cost = pl.CostEstimate(
            flops=2 * mp * self.np_ * self.kp,
            transcendentals=0,
            bytes_accessed=(
                mp * self.kp * x_isz * n_tiles_n        # x re-read per N tile
                + self.kp * self.np_ * w_isz * n_tiles_m  # w re-read per M tile
                + self.np_ * 4                            # bias
                + mp * self.np_ * o_isz),                 # output
        )

        # Double-buffered inputs + output + f32 accumulator, with headroom.
        vmem_bytes = (2 * tm * self.tk * x_isz
                      + 2 * self.tk * self.tn * w_isz
                      + 2 * tm * self.tn * o_isz
                      + 2 * self.tn * 4
                      + (tm * self.tn * 4 if self.k_tiled else 0))
        vmem_limit = min(64 << 20, max(32 << 20, (vmem_bytes * 3) // 2))

        if not self.k_tiled:
            out = pl.pallas_call(
                _linear_kernel_fullk,
                out_shape=jax.ShapeDtypeStruct((mp, self.np_), out_dtype),
                grid_spec=pltpu.PrefetchScalarGridSpec(
                    num_scalar_prefetch=0,
                    grid=(n_tiles_m, n_tiles_n),
                    in_specs=[
                        pl.BlockSpec((tm, self.tk), lambda i, j: (i, 0)),
                        pl.BlockSpec((self.tk, self.tn), lambda i, j: (0, j)),
                        pl.BlockSpec((1, self.tn), lambda i, j: (0, j)),
                    ],
                    out_specs=pl.BlockSpec((tm, self.tn), lambda i, j: (i, j)),
                ),
                compiler_params=pltpu.CompilerParams(
                    dimension_semantics=("parallel", "parallel"),
                    vmem_limit_bytes=vmem_limit,
                ),
                cost_estimate=cost,
            )(x2d, self.w, self.b)
        else:
            grid = (n_tiles_m, n_tiles_n, self.kp // self.tk)
            out = pl.pallas_call(
                _linear_kernel_acc,
                out_shape=jax.ShapeDtypeStruct((mp, self.np_), out_dtype),
                grid_spec=pltpu.PrefetchScalarGridSpec(
                    num_scalar_prefetch=0,
                    grid=grid,
                    in_specs=[
                        pl.BlockSpec((tm, self.tk), lambda i, j, k: (i, k)),
                        pl.BlockSpec((self.tk, self.tn), lambda i, j, k: (k, j)),
                        pl.BlockSpec((1, self.tn), lambda i, j, k: (0, j)),
                    ],
                    out_specs=pl.BlockSpec((tm, self.tn),
                                           lambda i, j, k: (i, j)),
                    scratch_shapes=[pltpu.VMEM((tm, self.tn), jnp.float32)],
                ),
                compiler_params=pltpu.CompilerParams(
                    dimension_semantics=("parallel", "parallel", "arbitrary"),
                    vmem_limit_bytes=vmem_limit,
                ),
                cost_estimate=cost,
            )(x2d, self.w, self.b)

        if mp != m or self.np_ != self.out_ch:
            out = out[:m, :self.out_ch]
        return out.reshape(*lead, self.out_ch)


def linear_norm(x, weight, bias=None, **kwargs):
    """Functional convenience wrapper. For repeated calls construct LinearNorm
    once so the weight transpose / pad / cast is hoisted out of the call path."""
    return LinearNorm(weight, bias, **kwargs)(x)


if __name__ == "__main__":
    key = jax.random.PRNGKey(0)
    k_x, k_w, k_b = jax.random.split(key, 3)

    batch, seq, in_channels, out_channels = 2, 8, 32, 64
    x = jax.random.normal(k_x, (batch, seq, in_channels), dtype=jnp.float32)
    bound = 1.0 / jnp.sqrt(in_channels)
    weight = jax.random.uniform(k_w, (out_channels, in_channels),
                                minval=-bound, maxval=bound, dtype=jnp.float32)
    bias = jax.random.uniform(k_b, (out_channels,),
                              minval=-bound, maxval=bound, dtype=jnp.float32)
    ref = jnp.einsum("bsi,oi->bso", x, weight) + bias

    # 1) Exact-path check (f32 compute) -- validates kernel logic bit-tightly.
    out_f32 = LinearNorm(weight, bias, compute_dtype=jnp.float32)(x)
    jax.block_until_ready(out_f32)
    assert out_f32.shape == (batch, seq, out_channels)
    assert jnp.allclose(out_f32, ref, atol=1e-5, rtol=1e-5)

    # 2) Default bf16-operand / f32-accumulate path (looser tolerance).
    out_bf16 = LinearNorm(weight, bias)(x)
    jax.block_until_ready(out_bf16)
    assert jnp.allclose(out_bf16, ref, atol=5e-2, rtol=5e-2)

    # 3) Ragged, multi-tile shapes with small tile caps -> exercises the
    #    K/M/N tiling, zero-padding and the pl.when accumulator epilogue.
    k_x2, k_w2, k_b2 = jax.random.split(jax.random.PRNGKey(1), 3)
    x_big = jax.random.normal(k_x2, (3, 37, 300), dtype=jnp.float32)
    w_big = jax.random.normal(k_w2, (200, 300), dtype=jnp.float32) * 0.05
    b_big = jax.random.normal(k_b2, (200,), dtype=jnp.float32)
    ref_big = jnp.einsum("bsi,oi->bso", x_big, w_big) + b_big

    out_big = LinearNorm(w_big, b_big, compute_dtype=jnp.float32,
                         tm_max=64, tn_max=128, tk_max=128)(x_big)
    jax.block_until_ready(out_big)
    assert jnp.allclose(out_big, ref_big, atol=1e-4, rtol=1e-4)

    # 4) Same ragged shapes with default caps -> single-K-block fast path,
    #    full-extent blocks (no padding), bf16 operands.
    out_big_bf16 = LinearNorm(w_big, b_big)(x_big)
    jax.block_until_ready(out_big_bf16)
    assert jnp.allclose(out_big_bf16, ref_big, atol=5e-2, rtol=5e-2)

    print("KERNEL_OK")
</pallas_src>

<mosaic_0001>
module attributes {stable_mosaic.version = 11 : i64} {
  func.func @_linear_kernel_fullk(%arg0: i32, %arg1: i32, %arg2: memref<16x32xf32, #tpu.memory_space<vmem>>, %arg3: memref<32x64xf32, #tpu.memory_space<vmem>>, %arg4: memref<1x64xf32, #tpu.memory_space<vmem>>, %arg5: memref<16x64xf32, #tpu.memory_space<vmem>>) attributes {dimension_semantics = [#tpu.dimension_semantics<parallel>, #tpu.dimension_semantics<parallel>], iteration_bounds = array<i64: 1, 1>, scalar_prefetch = 0 : i64, scratch_operands = 0 : i64, tpu.core_type = #tpu.core_type<tc>, window_params = [{transform_indices = @transform_0, window_bounds = array<i64: 16, 32>}, {transform_indices = @transform_1, window_bounds = array<i64: 32, 64>}, {transform_indices = @transform_2, window_bounds = array<i64: 1, 64>}, {transform_indices = @transform_3, window_bounds = array<i64: 16, 64>}]} {
    %c0 = arith.constant 0 : index
    %c0_0 = arith.constant 0 : index
    %0 = vector.load %arg2[%c0, %c0_0] : memref<16x32xf32, #tpu.memory_space<vmem>>, vector<16x32xf32>
    %c0_1 = arith.constant 0 : index
    %c0_2 = arith.constant 0 : index
    %1 = vector.load %arg3[%c0_1, %c0_2] : memref<32x64xf32, #tpu.memory_space<vmem>>, vector<32x64xf32>
    %cst = arith.constant dense<0.000000e+00> : vector<16x64xf32>
    %2 = tpu.matmul %0, %1, %cst {dimension_numbers = #tpu.dot_dimension_numbers<[1], [0], [0], [1], [0, 0, 1, 1], [], []>} : vector<16x32xf32>, vector<32x64xf32>, vector<16x64xf32> -> vector<16x64xf32>
    %c0_3 = arith.constant 0 : index
    %c0_4 = arith.constant 0 : index
    %3 = vector.load %arg4[%c0_3, %c0_4] : memref<1x64xf32, #tpu.memory_space<vmem>>, vector<1x64xf32>
    %4 = vector.broadcast %3 : vector<1x64xf32> to vector<16x64xf32>
    %5 = arith.addf %2, %4 : vector<16x64xf32>
    %c0_5 = arith.constant 0 : index
    %c0_6 = arith.constant 0 : index
    %6 = vector.load %arg5[%c0_5, %c0_6] : memref<16x64xf32, #tpu.memory_space<vmem>>, vector<16x64xf32>
    tpu.vector_store %arg5[%c0_5, %c0_6], %5 {strides = array<i32>} : memref<16x64xf32, #tpu.memory_space<vmem>>, vector<16x64xf32>,
    return
  }
  func.func @transform_0(%arg0: i32, %arg1: i32) -> (i32, i32) {
    %c0_i32 = arith.constant 0 : i32
    %c0_i32_0 = arith.constant 0 : i32
    return %arg0, %c0_i32 : i32, i32
  }
  func.func @transform_1(%arg0: i32, %arg1: i32) -> (i32, i32) {
    %c0_i32 = arith.constant 0 : i32
    %c0_i32_0 = arith.constant 0 : i32
    return %c0_i32, %arg1 : i32, i32
  }
  func.func @transform_2(%arg0: i32, %arg1: i32) -> (i32, i32) {
    %c0_i32 = arith.constant 0 : i32
    %c0_i32_0 = arith.constant 0 : i32
    return %c0_i32, %arg1 : i32, i32
  }
  func.func @transform_3(%arg0: i32, %arg1: i32) -> (i32, i32) {
    %c0_i32 = arith.constant 0 : i32
    return %arg0, %arg1 : i32, i32
  }
}

</mosaic_0001>

<llo_original>
// kernel: tpu_custom_call.1
$region0: #{tpu_custom_call.1}
  #allocation0 [shape = 'u32[]', space=smem, size = 0x4, offset = 0x4, fixed_abs, tag = 'smem constant byte address 0x4 - core index']
  #allocation1 [shape = 'u32[144,128]{1,0:T(1,128)}', space=vmem, size = 0x12000, scoped, tag = 'internal scratch']
  %s0 = inlined_call_operand.hbm [shape: f32[16,32], index: 0, kind: input, shape index: {}]
  %s1 = inlined_call_operand.hbm [shape: f32[32,64], index: 1, kind: input, shape index: {}]
  %s2 = inlined_call_operand.vmem [shape: f32[1,64], index: 2, kind: input, shape index: {}]
  %s3 = inlined_call_operand.hbm [shape: f32[16,64], index: 3, kind: output, shape index: {}]
  %s4 = sld [smem:[#allocation0]]
  $region30: #{tpu_custom_call.1} parent=0
    _
  %s6 = ssub.s32 1, %s4
  %s7 = scalar_select 0, %s6, %s4
  $region1: #{tpu_custom_call.1} parent=0
    #allocation2 [shape = 'u8[8192]{0}', space=vmem, size = 0x2000, scoped, tag = 'input window, operand 0, single buffered']
    #allocation3 [shape = 's32[1]{0}', space=sflag, size = 0x4, scoped, tag = 'scoped memory for tpu_custom_call.1']
    #allocation4 [shape = 's32[1]{0}', space=sflag, size = 0x4, scoped, tag = 'scoped memory for tpu_custom_call.1']
    #allocation5 [shape = 'u8[16384]{0}', space=vmem, size = 0x4000, scoped, tag = 'input window, operand 1, single buffered']
    #allocation6 [shape = 's32[1]{0}', space=sflag, size = 0x4, scoped, tag = 'scoped memory for tpu_custom_call.1']
    #allocation7 [shape = 'u8[8192]{0}', space=vmem, size = 0x2000, scoped, tag = 'output window, operand 0, single buffered']
    %8 = vsyncpa [#allocation3], 0
    %9 = vsyncpa [#allocation6], 0
    %10 = vsyncpa [#allocation4], 0
    // Predicated region
    $region2: #{tpu_custom_call.1} parent=1 // pred_check
      _
    $region3: #{tpu_custom_call.1} parent=1 // pred_check_branch
      %12 = sbr.rel (0) target = $region5
    $region4: #{tpu_custom_call.1} parent=1 // pred_region
      %s14 = ssub.s32 256, 256
      %15 = vsyncadd [#allocation3], %s14
      %s16 = sshll.u32 [#allocation2], 4
      %s17 = int_to_ptr.vmem [resolvable:$true] %s16
      %22 = dma.hbm_to_vmem [thread:$0]  %s0, 256, %s17, [#allocation3], 128, 128, 8
    $region5: #{tpu_custom_call.1} parent=1 // pred_fallthru
      _
    // Predicated region
    $region6: #{tpu_custom_call.1} parent=1 // pred_check
      _
    $region7: #{tpu_custom_call.1} parent=1 // pred_check_branch
      %24 = sbr.rel (0) target = $region9
    $region8: #{tpu_custom_call.1} parent=1 // pred_region
      %s26 = ssub.s32 512, 512
      %27 = vsyncadd [#allocation6], %s26
      %s28 = sshll.u32 [#allocation5], 4
      %s29 = int_to_ptr.vmem [resolvable:$true] %s28
      %34 = dma.hbm_to_vmem [thread:$0]  %s1, 512, %s29, [#allocation6], 128, 128, 8
    $region9: #{tpu_custom_call.1} parent=1 // pred_fallthru
      _
    // Predicated region
    $region10: #{tpu_custom_call.1} parent=1 // pred_check
      _
    $region11: #{tpu_custom_call.1} parent=1 // pred_check_branch
      %36 = sbr.rel (0) target = $region13
    $region12: #{tpu_custom_call.1} parent=1 // pred_region
      _
    $region13: #{tpu_custom_call.1} parent=1 // pred_fallthru
      _
    // Predicated region
    $region14: #{tpu_custom_call.1} parent=1 // pred_check
      _
    $region15: #{tpu_custom_call.1} parent=1 // pred_check_branch
      %38 = sbr.rel (0) target = $region17
    $region16: #{tpu_custom_call.1} parent=1 // pred_region
      %39 = dma.done [#allocation3], 256
    $region17: #{tpu_custom_call.1} parent=1 // pred_fallthru
      _
    // Predicated region
    $region18: #{tpu_custom_call.1} parent=1 // pred_check
      _
    $region19: #{tpu_custom_call.1} parent=1 // pred_check_branch
      %41 = sbr.rel (0) target = $region21
    $region20: #{tpu_custom_call.1} parent=1 // pred_region
      %42 = dma.done [#allocation6], 512
    $region21: #{tpu_custom_call.1} parent=1 // pred_fallthru
      _
    %v43 = vld [vmem:[#allocation2] sm:$0xff]
    %v44 = vld [vmem:[#allocation2 + $0x8] sm:$0xff]
    %v45 = vld [vmem:[#allocation5] sm:$0xff]
    %v46 = vld [vmem:[#allocation5 + $0x8] sm:$0xff]
    %v47 = vld [vmem:[#allocation5 + $0x10] sm:$0xff]
    %v48 = vld [vmem:[#allocation5 + $0x18] sm:$0xff]
    %v49 = vld [vmem:[%s2] sm:$0x1]
    %v51 = vlaneseq
    %v52 = vshrl.u32 %v51, 7
    %v53 = vsub.s32 0, %v52
    %v54 = vrot.slane %v49, %v53
    %vm56 = vcmask 261120
    %v58 = vsel %vm56, %v43, 0
    %v61 = vsel %vm56, %v44, 0
    %63 = vmatprep.subr.mxu0 0.0
    %64 = vmatpush1.msra.mxu0 %v45
    %65 = vmatprep.subr.mxu0 0.0
    %66 = vmatpush1.msra.mxu0 %v46
    %67 = vmatprep.subr.mxu0 0.0
    %68 = vmatpush1.msra.mxu0 %v47
    %69 = vmatprep.subr.mxu0 0.0
    %70 = vmatpush1.msra.mxu0 %v48
    %71 = vmatprep.subr.mxu0 0.0
    %72 = vmatpush1.msra.mxu0 0.0
    %73 = vmatprep.subr.mxu0 0.0
    %74 = vmatpush1.msra.mxu0 0.0
    %75 = vmatprep.subr.mxu0 0.0
    %76 = vmatpush1.msra.mxu0 0.0
    %77 = vmatprep.subr.mxu0 0.0
    %78 = vmatpush1.msra.mxu0 0.0
    %79 = vmatprep.subr.mxu0 0.0
    %80 = vmatpush1.msra.mxu0 0.0
    %81 = vmatprep.subr.mxu0 0.0
    %82 = vmatpush1.msra.mxu0 0.0
    %83 = vmatprep.subr.mxu0 0.0
    %84 = vmatpush1.msra.mxu0 0.0
    %85 = vmatprep.subr.mxu0 0.0
    %86 = vmatpush1.msra.mxu0 0.0
    %87 = vmatprep.subr.mxu0 0.0
    %88 = vmatpush1.msra.mxu0 0.0
    %89 = vmatprep.subr.mxu0 0.0
    %90 = vmatpush1.msra.mxu0 0.0
    %91 = vmatprep.subr.mxu0 0.0
    %92 = vmatpush1.msra.mxu0 0.0
    %93 = vmatprep.subr.mxu0 0.0
    %94 = vmatpush1.msra.mxu0 0.0
    %95 = vmatprep.subr.mxu0 0.0
    %96 = vmatpush1.msra.mxu0 0.0
    %97 = vmatprep.subr.mxu0 0.0
    %98 = vmatpush1.msra.mxu0 0.0
    %99 = vmatprep.subr.mxu0 0.0
    %100 = vmatpush1.msra.mxu0 0.0
    %101 = vmatprep.subr.mxu0 0.0
    %102 = vmatpush1.msra.mxu0 0.0
    %103 = vmatprep.subr.mxu0 0.0
    %104 = vmatpush1.msra.mxu0 0.0
    %105 = vmatprep.subr.mxu0 0.0
    %106 = vmatpush1.msra.mxu0 0.0
    %107 = vmatprep.subr.mxu0 0.0
    %108 = vmatpush1.msra.mxu0 0.0
    %109 = vmatprep.subr.mxu0 0.0
    %110 = vmatpush1.msra.mxu0 0.0
    %111 = vmatprep.subr.mxu0 0.0
    %112 = vmatpush1.msra.mxu0 0.0
    %113 = vmatprep.subr.mxu0 0.0
    %114 = vmatpush1.msra.mxu0 0.0
    %115 = vmatprep.subr.mxu0 0.0
    %116 = vmatpush1.msra.mxu0 0.0
    %117 = vmatprep.subr.mxu0 0.0
    %118 = vmatpush1.msra.mxu0 0.0
    %119 = vmatprep.subr.mxu0 0.0
    %120 = vmatpush1.msra.mxu0 0.0
    %121 = vmatprep.subr.mxu0 0.0
    %122 = vmatpush1.msra.mxu0 0.0
    %123 = vmatprep.subr.mxu0 0.0
    %124 = vmatpush1.msra.mxu0 0.0
    %125 = vmatprep.subr.mxu0 0.0
    %126 = vmatpush1.msra.mxu0 0.0
    %127 = vmatprep.mubr.f32.mxu0 0.0
    %128 = vmatmul.mubr.f32.gmra.mrb[0].mxu0 %v58
    %v129 = vpop.f32.mrb[0].mxu0
    %v130 = vadd.f32 %v54, %v129
    %v131 = vpop.f32.mrb[0].mxu0
    %132 = vmatprep.mubr.f32.mxu0 0.0
    %133 = vmatmul.mubr.f32.gmra.mrb[0].mxu0 %v61
    %v134 = vpop.f32.mrb[0].mxu0
    %v135 = vadd.f32 %v54, %v134
    %v136 = vpop.f32.mrb[0].mxu0
    %137 = vdwg.mxu0
    %vm138 = vcmask 523264
    %139 = vst.msk [vmem:[#allocation7] sm:$0xff] %vm138, %v130
    %140 = vst.msk [vmem:[#allocation7 + $0x8] sm:$0xff] %vm138, %v135
    // Predicated region
    $region22: #{tpu_custom_call.1} parent=1 // pred_check
      _
    $region23: #{tpu_custom_call.1} parent=1 // pred_check_branch
      %142 = sbr.rel (0) target = $region25
    $region24: #{tpu_custom_call.1} parent=1 // pred_region
      %s144 = ssub.s32 256, 256
      %145 = vsyncadd [#allocation4], %s144
      %s146 = sshll.u32 [#allocation7], 4
      %s147 = int_to_ptr.vmem [resolvable:$true] %s146
      %152 = dma.vmem_to_hbm [thread:$0]  %s147, 256, %s3, [#allocation4], 128, 128, 8
    $region25: #{tpu_custom_call.1} parent=1 // pred_fallthru
      _
    // Predicated region
    $region26: #{tpu_custom_call.1} parent=1 // pred_check
      _
    $region27: #{tpu_custom_call.1} parent=1 // pred_check_branch
      %154 = sbr.rel (0) target = $region29
    $region28: #{tpu_custom_call.1} parent=1 // pred_region
      %155 = dma.done [#allocation4], 256
    $region29: #{tpu_custom_call.1} parent=1 // pred_fallthru
      _
    %156 = vsyncpa [#allocation3], 1
    %157 = vsyncpa [#allocation6], 1
    %158 = vsyncpa [#allocation4], 1

</llo_original>
